<compile_context>
chip_gen: v7x
topology: tpu7x:2x2x1
jax: 0.10.0
libtpu: 0.0.40
codegen_flags: <defaults>
</compile_context>

<pallas_src>
import functools

import jax
import jax.numpy as jnp
from jax.experimental import pallas as pl
from jax.experimental.pallas import tpu as pltpu


def _ece_kernel(conf_ref, risk_ref, out_ref, *, n_bins, rows, tile_rows,
                t_total, t_per_slice, need_row_mask):
    i = pl.program_id(0)            # "parallel" slice (TensorCore on v7x)
    j = pl.program_id(1)            # row-tile index within this slice
    t = i * t_per_slice + j         # logical row-tile index

    # Zero this slice's per-bin accumulator slab at the start of its j-loop
    # (the output block depends only on i, so it stays VMEM-resident across j).
    @pl.when(j == 0)
    def _init():
        out_ref[...] = jnp.zeros(out_ref.shape, jnp.float32)

    # Skip the duplicate / out-of-range tail tiles created by the slice split.
    @pl.when(t < t_total)
    def _accumulate():
        n_chunks = tile_rows // 8                       # static
        base_row = t * tile_rows
        if need_row_mask:                               # static Python flag
            row_iota = jax.lax.broadcasted_iota(jnp.int32, (8, 128), 0)

        def body(c, accs):
            r0 = pl.multiple_of(c * 8, 8)
            conf = conf_ref[pl.ds(r0, 8), :]            # (8, 128) f32, one vreg
            rsk = risk_ref[pl.ds(r0, 8), :]
            d = conf + rsk - 1.0                        # conf - (1 - risk)
            if need_row_mask:
                # Zero contributions from rows past the logical end; d == 0
                # contributes nothing regardless of the (garbage) bin index.
                d = jnp.where(row_iota < rows - (base_row + r0), d, 0.0)
            # bin id in 1..n_bins for conf in (0, 1]; anything else matches no bin
            idx = jnp.ceil(conf * jnp.float32(n_bins))
            return tuple(
                accs[b] + jnp.where(idx == jnp.float32(b + 1), d, 0.0)
                for b in range(n_bins)
            )

        zero = jnp.zeros((8, 128), jnp.float32)
        accs = jax.lax.fori_loop(0, n_chunks, body,
                                 tuple(zero for _ in range(n_bins)),
                                 unroll=min(4, n_chunks))
        # O(1) VMEM traffic per tile: fold the vreg accumulators into the
        # resident per-bin output slab (no XLU reductions in the steady state).
        for b in range(n_bins):
            out_ref[0, b, :, :] += accs[b]


@functools.partial(jax.jit, static_argnames=("n_bins", "block_rows"))
def ece_pallas(confidences, risk, n_bins=10, block_rows=2048):
    conf = confidences.reshape(-1).astype(jnp.float32)
    rsk = risk.reshape(-1).astype(jnp.float32)
    n = conf.shape[0]

    # Pad only when numel is not already a multiple of 8*128 (common tensor
    # sizes need no HBM copy at all).  Padded confidences = -1 never land in
    # any bin (bins span (0, 1]), so they contribute 0.
    pad = (-n) % (8 * 128)
    if pad:
        conf = jnp.pad(conf, (0, pad), constant_values=-1.0)
        rsk = jnp.pad(rsk, (0, pad), constant_values=0.0)

    rows = conf.shape[0] // 128                 # always a multiple of 8
    conf2 = conf.reshape(rows, 128)
    rsk2 = rsk.reshape(rows, 128)

    block_rows = max(8, (block_rows // 8) * 8)  # keep sublane alignment
    tile_rows = min(block_rows, rows)           # multiple of 8 (or == rows)
    t_total = (rows + tile_rows - 1) // tile_rows
    need_row_mask = (t_total * tile_rows != rows)

    # 2-way "parallel" leading axis: v7x shards the row-tiles across its two
    # TensorCores; single-core chips just iterate it sequentially.
    n_slices = 2 if t_total >= 2 else 1
    t_per_slice = (t_total + n_slices - 1) // n_slices

    kernel = functools.partial(
        _ece_kernel, n_bins=n_bins, rows=rows, tile_rows=tile_rows,
        t_total=t_total, t_per_slice=t_per_slice, need_row_mask=need_row_mask)

    def row_tile_map(i, j):
        # Clamp so duplicate tail tiles of the slice split stay in bounds;
        # their contribution is skipped inside the kernel via pl.when.
        return (jnp.minimum(i * t_per_slice + j, t_total - 1), 0)

    partials = pl.pallas_call(
        kernel,
        out_shape=jax.ShapeDtypeStruct((n_slices, n_bins, 8, 128), jnp.float32),
        grid=(n_slices, t_per_slice),
        in_specs=[pl.BlockSpec((tile_rows, 128), row_tile_map),
                  pl.BlockSpec((tile_rows, 128), row_tile_map)],
        out_specs=pl.BlockSpec((1, n_bins, 8, 128), lambda i, j: (i, 0, 0, 0)),
        compiler_params=pltpu.CompilerParams(
            dimension_semantics=("parallel", "arbitrary")),
    )(conf2, rsk2)

    # Tiny finalize (fused into the same jit program): global per-bin sums ->
    # |.| -> sum -> /N on a (n_slices, n_bins, 8, 128) array.
    per_bin = jnp.sum(partials, axis=(0, 2, 3))         # (n_bins,)
    return jnp.sum(jnp.abs(per_bin)) / jnp.float32(n)


def _ece_ref(confidences, risk, n_bins=10):
    """Pure-JAX reference mirroring the PyTorch loop (sanity check)."""
    conf = confidences.reshape(-1).astype(jnp.float32)
    acc = 1.0 - risk.reshape(-1).astype(jnp.float32)
    boundaries = jnp.linspace(0.0, 1.0, n_bins + 1)
    ece = jnp.float32(0.0)
    for i in range(n_bins):
        lo, hi = boundaries[i], boundaries[i + 1]
        in_bin = jnp.logical_and(conf > lo, conf <= hi)
        prop = jnp.mean(in_bin.astype(jnp.float32))
        sum_conf = jnp.sum(jnp.where(in_bin, conf, 0.0))
        sum_acc = jnp.sum(jnp.where(in_bin, acc, 0.0))
        cnt = jnp.maximum(jnp.sum(in_bin.astype(jnp.float32)), 1.0)
        term = jnp.abs(sum_conf / cnt - sum_acc / cnt) * prop
        ece = ece + jnp.where(prop > 0, term, 0.0)
    return ece


if __name__ == "__main__":
    key = jax.random.PRNGKey(0)
    k1, k2, k3, k4 = jax.random.split(key, 4)

    # Small inputs consistent with the module's forward (any-shape confidence /
    # risk tensors with values in [0, 1]).
    confidences = jax.random.uniform(k1, (2, 4, 16, 16), dtype=jnp.float32)
    risk = jax.random.uniform(k2, (2, 4, 16, 16), dtype=jnp.float32)

    ece = ece_pallas(confidences, risk)
    jax.block_until_ready(ece)
    ref = _ece_ref(confidences, risk)
    assert jnp.abs(ece - ref) < 1e-4, (float(ece), float(ref))

    # Ragged / multi-tile / two-slice path (small block_rows to exercise the
    # grid, the in-kernel row mask and the pad path at a tiny size).
    conf2 = jax.random.uniform(k3, (3, 7, 97, 31), dtype=jnp.float32)
    risk2 = jax.random.uniform(k4, (3, 7, 97, 31), dtype=jnp.float32)
    ece2 = ece_pallas(conf2, risk2, block_rows=64)
    jax.block_until_ready(ece2)
    ref2 = _ece_ref(conf2, risk2)
    assert jnp.abs(ece2 - ref2) < 1e-4, (float(ece2), float(ref2))

    print("KERNEL_OK")
</pallas_src>

<mosaic_0001>
module attributes {stable_mosaic.version = 11 : i64} {
  func.func @_ece_kernel(%arg0: i32, %arg1: i32, %arg2: memref<16x128xf32, #tpu.memory_space<vmem>>, %arg3: memref<16x128xf32, #tpu.memory_space<vmem>>, %arg4: memref<1x10x8x128xf32, #tpu.memory_space<vmem>>) attributes {dimension_semantics = [#tpu.dimension_semantics<parallel>, #tpu.dimension_semantics<arbitrary>], iteration_bounds = array<i64: 1, 1>, scalar_prefetch = 0 : i64, scratch_operands = 0 : i64, tpu.core_type = #tpu.core_type<tc>, window_params = [{transform_indices = @transform_0, window_bounds = array<i64: 16, 128>}, {transform_indices = @transform_1, window_bounds = array<i64: 16, 128>}, {transform_indices = @transform_2, window_bounds = array<i64: 1, 10, 8, 128>}]} {
    %c1_i32 = arith.constant 1 : i32
    %0 = arith.muli %arg0, %c1_i32 : i32
    %1 = arith.addi %0, %arg1 : i32
    %c0_i32 = arith.constant 0 : i32
    %2 = arith.cmpi eq, %arg1, %c0_i32 : i32
    %3 = arith.extui %2 : i1 to i32
    %c0_i32_0 = arith.constant 0 : i32
    %4 = arith.cmpi ne, %3, %c0_i32_0 : i32
    scf.if %4 {
      %cst = arith.constant 0.000000e+00 : f32
      %8 = vector.broadcast %cst : f32 to vector<1x10x8x128xf32>
      %c0 = arith.constant 0 : index
      %c0_3 = arith.constant 0 : index
      %c0_4 = arith.constant 0 : index
      %c0_5 = arith.constant 0 : index
      %9 = vector.load %arg4[%c0, %c0_3, %c0_4, %c0_5] : memref<1x10x8x128xf32, #tpu.memory_space<vmem>>, vector<1x10x8x128xf32>
      tpu.vector_store %arg4[%c0, %c0_3, %c0_4, %c0_5], %8 {strides = array<i32>} : memref<1x10x8x128xf32, #tpu.memory_space<vmem>>, vector<1x10x8x128xf32>,
    } else {
    }
    %c1_i32_1 = arith.constant 1 : i32
    %5 = arith.cmpi slt, %1, %c1_i32_1 : i32
    %6 = arith.extui %5 : i1 to i32
    %c0_i32_2 = arith.constant 0 : i32
    %7 = arith.cmpi ne, %6, %c0_i32_2 : i32
    scf.if %7 {
      %cst = arith.constant 0.000000e+00 : f32
      %8 = vector.broadcast %cst : f32 to vector<8x128xf32>
      %c0_i32_3 = arith.constant 0 : i32
      %c8_i32 = arith.constant 8 : i32
      %9 = arith.muli %c0_i32_3, %c8_i32 : i32
      %10 = tpu.assume_multiple %9, 8 : i32
      %11 = arith.index_cast %10 : i32 to index
      %c0 = arith.constant 0 : index
      %12 = vector.load %arg2[%11, %c0] : memref<16x128xf32, #tpu.memory_space<vmem>>, vector<8x128xf32>
      %13 = arith.index_cast %10 : i32 to index
      %c0_4 = arith.constant 0 : index
      %14 = vector.load %arg3[%13, %c0_4] : memref<16x128xf32, #tpu.memory_space<vmem>>, vector<8x128xf32>
      %15 = arith.addf %12, %14 : vector<8x128xf32>
      %cst_5 = arith.constant 1.000000e+00 : f32
      %16 = vector.broadcast %cst_5 : f32 to vector<8x128xf32>
      %17 = arith.subf %15, %16 : vector<8x128xf32>
      %cst_6 = arith.constant 1.000000e+01 : f32
      %18 = vector.broadcast %cst_6 : f32 to vector<8x128xf32>
      %19 = arith.mulf %12, %18 : vector<8x128xf32>
      %20 = math.ceil %19 : vector<8x128xf32>
      %cst_7 = arith.constant 1.000000e+00 : f32
      %21 = vector.broadcast %cst_7 : f32 to vector<8x128xf32>
      %22 = arith.cmpf oeq, %20, %21 : vector<8x128xf32>
      %cst_8 = arith.constant 0.000000e+00 : f32
      %23 = vector.broadcast %cst_8 : f32 to vector<8x128xf32>
      %24 = arith.select %22, %17, %23 : vector<8x128xi1>, vector<8x128xf32>
      %25 = arith.addf %8, %24 : vector<8x128xf32>
      %cst_9 = arith.constant 2.000000e+00 : f32
      %26 = vector.broadcast %cst_9 : f32 to vector<8x128xf32>
      %27 = arith.cmpf oeq, %20, %26 : vector<8x128xf32>
      %cst_10 = arith.constant 0.000000e+00 : f32
      %28 = vector.broadcast %cst_10 : f32 to vector<8x128xf32>
      %29 = arith.select %27, %17, %28 : vector<8x128xi1>, vector<8x128xf32>
      %30 = arith.addf %8, %29 : vector<8x128xf32>
      %cst_11 = arith.constant 3.000000e+00 : f32
      %31 = vector.broadcast %cst_11 : f32 to vector<8x128xf32>
      %32 = arith.cmpf oeq, %20, %31 : vector<8x128xf32>
      %cst_12 = arith.constant 0.000000e+00 : f32
      %33 = vector.broadcast %cst_12 : f32 to vector<8x128xf32>
      %34 = arith.select %32, %17, %33 : vector<8x128xi1>, vector<8x128xf32>
      %35 = arith.addf %8, %34 : vector<8x128xf32>
      %cst_13 = arith.constant 4.000000e+00 : f32
      %36 = vector.broadcast %cst_13 : f32 to vector<8x128xf32>
      %37 = arith.cmpf oeq, %20, %36 : vector<8x128xf32>
      %cst_14 = arith.constant 0.000000e+00 : f32
      %38 = vector.broadcast %cst_14 : f32 to vector<8x128xf32>
      %39 = arith.select %37, %17, %38 : vector<8x128xi1>, vector<8x128xf32>
      %40 = arith.addf %8, %39 : vector<8x128xf32>
      %cst_15 = arith.constant 5.000000e+00 : f32
      %41 = vector.broadcast %cst_15 : f32 to vector<8x128xf32>
      %42 = arith.cmpf oeq, %20, %41 : vector<8x128xf32>
      %cst_16 = arith.constant 0.000000e+00 : f32
      %43 = vector.broadcast %cst_16 : f32 to vector<8x128xf32>
      %44 = arith.select %42, %17, %43 : vector<8x128xi1>, vector<8x128xf32>
      %45 = arith.addf %8, %44 : vector<8x128xf32>
      %cst_17 = arith.constant 6.000000e+00 : f32
      %46 = vector.broadcast %cst_17 : f32 to vector<8x128xf32>
      %47 = arith.cmpf oeq, %20, %46 : vector<8x128xf32>
      %cst_18 = arith.constant 0.000000e+00 : f32
      %48 = vector.broadcast %cst_18 : f32 to vector<8x128xf32>
      %49 = arith.select %47, %17, %48 : vector<8x128xi1>, vector<8x128xf32>
      %50 = arith.addf %8, %49 : vector<8x128xf32>
      %cst_19 = arith.constant 7.000000e+00 : f32
      %51 = vector.broadcast %cst_19 : f32 to vector<8x128xf32>
      %52 = arith.cmpf oeq, %20, %51 : vector<8x128xf32>
      %cst_20 = arith.constant 0.000000e+00 : f32
      %53 = vector.broadcast %cst_20 : f32 to vector<8x128xf32>
      %54 = arith.select %52, %17, %53 : vector<8x128xi1>, vector<8x128xf32>
      %55 = arith.addf %8, %54 : vector<8x128xf32>
      %cst_21 = arith.constant 8.000000e+00 : f32
      %56 = vector.broadcast %cst_21 : f32 to vector<8x128xf32>
      %57 = arith.cmpf oeq, %20, %56 : vector<8x128xf32>
      %cst_22 = arith.constant 0.000000e+00 : f32
      %58 = vector.broadcast %cst_22 : f32 to vector<8x128xf32>
      %59 = arith.select %57, %17, %58 : vector<8x128xi1>, vector<8x128xf32>
      %60 = arith.addf %8, %59 : vector<8x128xf32>
      %cst_23 = arith.constant 9.000000e+00 : f32
      %61 = vector.broadcast %cst_23 : f32 to vector<8x128xf32>
      %62 = arith.cmpf oeq, %20, %61 : vector<8x128xf32>
      %cst_24 = arith.constant 0.000000e+00 : f32
      %63 = vector.broadcast %cst_24 : f32 to vector<8x128xf32>
      %64 = arith.select %62, %17, %63 : vector<8x128xi1>, vector<8x128xf32>
      %65 = arith.addf %8, %64 : vector<8x128xf32>
      %cst_25 = arith.constant 1.000000e+01 : f32
      %66 = vector.broadcast %cst_25 : f32 to vector<8x128xf32>
      %67 = arith.cmpf oeq, %20, %66 : vector<8x128xf32>
      %cst_26 = arith.constant 0.000000e+00 : f32
      %68 = vector.broadcast %cst_26 : f32 to vector<8x128xf32>
      %69 = arith.select %67, %17, %68 : vector<8x128xi1>, vector<8x128xf32>
      %70 = arith.addf %8, %69 : vector<8x128xf32>
      %c1_i32_27 = arith.constant 1 : i32
      %c8_i32_28 = arith.constant 8 : i32
      %71 = arith.muli %c1_i32_27, %c8_i32_28 : i32
      %72 = tpu.assume_multiple %71, 8 : i32
      %73 = arith.index_cast %72 : i32 to index
      %c0_29 = arith.constant 0 : index
      %74 = vector.load %arg2[%73, %c0_29] : memref<16x128xf32, #tpu.memory_space<vmem>>, vector<8x128xf32>
      %75 = arith.index_cast %72 : i32 to index
      %c0_30 = arith.constant 0 : index
      %76 = vector.load %arg3[%75, %c0_30] : memref<16x128xf32, #tpu.memory_space<vmem>>, vector<8x128xf32>
      %77 = arith.addf %74, %76 : vector<8x128xf32>
      %cst_31 = arith.constant 1.000000e+00 : f32
      %78 = vector.broadcast %cst_31 : f32 to vector<8x128xf32>
      %79 = arith.subf %77, %78 : vector<8x128xf32>
      %cst_32 = arith.constant 1.000000e+01 : f32
      %80 = vector.broadcast %cst_32 : f32 to vector<8x128xf32>
      %81 = arith.mulf %74, %80 : vector<8x128xf32>
      %82 = math.ceil %81 : vector<8x128xf32>
      %cst_33 = arith.constant 1.000000e+00 : f32
      %83 = vector.broadcast %cst_33 : f32 to vector<8x128xf32>
      %84 = arith.cmpf oeq, %82, %83 : vector<8x128xf32>
      %cst_34 = arith.constant 0.000000e+00 : f32
      %85 = vector.broadcast %cst_34 : f32 to vector<8x128xf32>
      %86 = arith.select %84, %79, %85 : vector<8x128xi1>, vector<8x128xf32>
      %87 = arith.addf %25, %86 : vector<8x128xf32>
      %cst_35 = arith.constant 2.000000e+00 : f32
      %88 = vector.broadcast %cst_35 : f32 to vector<8x128xf32>
      %89 = arith.cmpf oeq, %82, %88 : vector<8x128xf32>
      %cst_36 = arith.constant 0.000000e+00 : f32
      %90 = vector.broadcast %cst_36 : f32 to vector<8x128xf32>
      %91 = arith.select %89, %79, %90 : vector<8x128xi1>, vector<8x128xf32>
      %92 = arith.addf %30, %91 : vector<8x128xf32>
      %cst_37 = arith.constant 3.000000e+00 : f32
      %93 = vector.broadcast %cst_37 : f32 to vector<8x128xf32>
      %94 = arith.cmpf oeq, %82, %93 : vector<8x128xf32>
      %cst_38 = arith.constant 0.000000e+00 : f32
      %95 = vector.broadcast %cst_38 : f32 to vector<8x128xf32>
      %96 = arith.select %94, %79, %95 : vector<8x128xi1>, vector<8x128xf32>
      %97 = arith.addf %35, %96 : vector<8x128xf32>
      %cst_39 = arith.constant 4.000000e+00 : f32
      %98 = vector.broadcast %cst_39 : f32 to vector<8x128xf32>
      %99 = arith.cmpf oeq, %82, %98 : vector<8x128xf32>
      %cst_40 = arith.constant 0.000000e+00 : f32
      %100 = vector.broadcast %cst_40 : f32 to vector<8x128xf32>
      %101 = arith.select %99, %79, %100 : vector<8x128xi1>, vector<8x128xf32>
      %102 = arith.addf %40, %101 : vector<8x128xf32>
      %cst_41 = arith.constant 5.000000e+00 : f32
      %103 = vector.broadcast %cst_41 : f32 to vector<8x128xf32>
      %104 = arith.cmpf oeq, %82, %103 : vector<8x128xf32>
      %cst_42 = arith.constant 0.000000e+00 : f32
      %105 = vector.broadcast %cst_42 : f32 to vector<8x128xf32>
      %106 = arith.select %104, %79, %105 : vector<8x128xi1>, vector<8x128xf32>
      %107 = arith.addf %45, %106 : vector<8x128xf32>
      %cst_43 = arith.constant 6.000000e+00 : f32
      %108 = vector.broadcast %cst_43 : f32 to vector<8x128xf32>
      %109 = arith.cmpf oeq, %82, %108 : vector<8x128xf32>
      %cst_44 = arith.constant 0.000000e+00 : f32
      %110 = vector.broadcast %cst_44 : f32 to vector<8x128xf32>
      %111 = arith.select %109, %79, %110 : vector<8x128xi1>, vector<8x128xf32>
      %112 = arith.addf %50, %111 : vector<8x128xf32>
      %cst_45 = arith.constant 7.000000e+00 : f32
      %113 = vector.broadcast %cst_45 : f32 to vector<8x128xf32>
      %114 = arith.cmpf oeq, %82, %113 : vector<8x128xf32>
      %cst_46 = arith.constant 0.000000e+00 : f32
      %115 = vector.broadcast %cst_46 : f32 to vector<8x128xf32>
      %116 = arith.select %114, %79, %115 : vector<8x128xi1>, vector<8x128xf32>
      %117 = arith.addf %55, %116 : vector<8x128xf32>
      %cst_47 = arith.constant 8.000000e+00 : f32
      %118 = vector.broadcast %cst_47 : f32 to vector<8x128xf32>
      %119 = arith.cmpf oeq, %82, %118 : vector<8x128xf32>
      %cst_48 = arith.constant 0.000000e+00 : f32
      %120 = vector.broadcast %cst_48 : f32 to vector<8x128xf32>
      %121 = arith.select %119, %79, %120 : vector<8x128xi1>, vector<8x128xf32>
      %122 = arith.addf %60, %121 : vector<8x128xf32>
      %cst_49 = arith.constant 9.000000e+00 : f32
      %123 = vector.broadcast %cst_49 : f32 to vector<8x128xf32>
      %124 = arith.cmpf oeq, %82, %123 : vector<8x128xf32>
      %cst_50 = arith.constant 0.000000e+00 : f32
      %125 = vector.broadcast %cst_50 : f32 to vector<8x128xf32>
      %126 = arith.select %124, %79, %125 : vector<8x128xi1>, vector<8x128xf32>
      %127 = arith.addf %65, %126 : vector<8x128xf32>
      %cst_51 = arith.constant 1.000000e+01 : f32
      %128 = vector.broadcast %cst_51 : f32 to vector<8x128xf32>
      %129 = arith.cmpf oeq, %82, %128 : vector<8x128xf32>
      %cst_52 = arith.constant 0.000000e+00 : f32
      %130 = vector.broadcast %cst_52 : f32 to vector<8x128xf32>
      %131 = arith.select %129, %79, %130 : vector<8x128xi1>, vector<8x128xf32>
      %132 = arith.addf %70, %131 : vector<8x128xf32>
      %c2_i32 = arith.constant 2 : i32
      %c0_53 = arith.constant 0 : index
      %c0_54 = arith.constant 0 : index
      %c0_55 = arith.constant 0 : index
      %c0_56 = arith.constant 0 : index
      %133 = vector.load %arg4[%c0_53, %c0_54, %c0_55, %c0_56] : memref<1x10x8x128xf32, #tpu.memory_space<vmem>>, vector<1x1x8x128xf32>
      %134 = vector.shape_cast %133 : vector<1x1x8x128xf32> to vector<8x128xf32>
      %135 = arith.addf %134, %87 : vector<8x128xf32>
      %c0_57 = arith.constant 0 : index
      %c0_58 = arith.constant 0 : index
      %c0_59 = arith.constant 0 : index
      %c0_60 = arith.constant 0 : index
      %136 = vector.load %arg4[%c0_57, %c0_58, %c0_59, %c0_60] : memref<1x10x8x128xf32, #tpu.memory_space<vmem>>, vector<1x1x8x128xf32>
      %137 = vector.shape_cast %136 : vector<1x1x8x128xf32> to vector<8x128xf32>
      %138 = vector.shape_cast %135 : vector<8x128xf32> to vector<1x1x8x128xf32>
      tpu.vector_store %arg4[%c0_57, %c0_58, %c0_59, %c0_60], %138 {strides = array<i32>} : memref<1x10x8x128xf32, #tpu.memory_space<vmem>>, vector<1x1x8x128xf32>,
      %c0_61 = arith.constant 0 : index
      %c1 = arith.constant 1 : index
      %c0_62 = arith.constant 0 : index
      %c0_63 = arith.constant 0 : index
      %139 = vector.load %arg4[%c0_61, %c1, %c0_62, %c0_63] : memref<1x10x8x128xf32, #tpu.memory_space<vmem>>, vector<1x1x8x128xf32>
      %140 = vector.shape_cast %139 : vector<1x1x8x128xf32> to vector<8x128xf32>
      %141 = arith.addf %140, %92 : vector<8x128xf32>
      %c0_64 = arith.constant 0 : index
      %c1_65 = arith.constant 1 : index
      %c0_66 = arith.constant 0 : index
      %c0_67 = arith.constant 0 : index
      %142 = vector.load %arg4[%c0_64, %c1_65, %c0_66, %c0_67] : memref<1x10x8x128xf32, #tpu.memory_space<vmem>>, vector<1x1x8x128xf32>
      %143 = vector.shape_cast %142 : vector<1x1x8x128xf32> to vector<8x128xf32>
      %144 = vector.shape_cast %141 : vector<8x128xf32> to vector<1x1x8x128xf32>
      tpu.vector_store %arg4[%c0_64, %c1_65, %c0_66, %c0_67], %144 {strides = array<i32>} : memref<1x10x8x128xf32, #tpu.memory_space<vmem>>, vector<1x1x8x128xf32>,
      %c0_68 = arith.constant 0 : index
      %c2 = arith.constant 2 : index
      %c0_69 = arith.constant 0 : index
      %c0_70 = arith.constant 0 : index
      %145 = vector.load %arg4[%c0_68, %c2, %c0_69, %c0_70] : memref<1x10x8x128xf32, #tpu.memory_space<vmem>>, vector<1x1x8x128xf32>
      %146 = vector.shape_cast %145 : vector<1x1x8x128xf32> to vector<8x128xf32>
      %147 = arith.addf %146, %97 : vector<8x128xf32>
      %c0_71 = arith.constant 0 : index
      %c2_72 = arith.constant 2 : index
      %c0_73 = arith.constant 0 : index
      %c0_74 = arith.constant 0 : index
      %148 = vector.load %arg4[%c0_71, %c2_72, %c0_73, %c0_74] : memref<1x10x8x128xf32, #tpu.memory_space<vmem>>, vector<1x1x8x128xf32>
      %149 = vector.shape_cast %148 : vector<1x1x8x128xf32> to vector<8x128xf32>
      %150 = vector.shape_cast %147 : vector<8x128xf32> to vector<1x1x8x128xf32>
      tpu.vector_store %arg4[%c0_71, %c2_72, %c0_73, %c0_74], %150 {strides = array<i32>} : memref<1x10x8x128xf32, #tpu.memory_space<vmem>>, vector<1x1x8x128xf32>,
      %c0_75 = arith.constant 0 : index
      %c3 = arith.constant 3 : index
      %c0_76 = arith.constant 0 : index
      %c0_77 = arith.constant 0 : index
      %151 = vector.load %arg4[%c0_75, %c3, %c0_76, %c0_77] : memref<1x10x8x128xf32, #tpu.memory_space<vmem>>, vector<1x1x8x128xf32>
      %152 = vector.shape_cast %151 : vector<1x1x8x128xf32> to vector<8x128xf32>
      %153 = arith.addf %152, %102 : vector<8x128xf32>
      %c0_78 = arith.constant 0 : index
      %c3_79 = arith.constant 3 : index
      %c0_80 = arith.constant 0 : index
      %c0_81 = arith.constant 0 : index
      %154 = vector.load %arg4[%c0_78, %c3_79, %c0_80, %c0_81] : memref<1x10x8x128xf32, #tpu.memory_space<vmem>>, vector<1x1x8x128xf32>
      %155 = vector.shape_cast %154 : vector<1x1x8x128xf32> to vector<8x128xf32>
      %156 = vector.shape_cast %153 : vector<8x128xf32> to vector<1x1x8x128xf32>
      tpu.vector_store %arg4[%c0_78, %c3_79, %c0_80, %c0_81], %156 {strides = array<i32>} : memref<1x10x8x128xf32, #tpu.memory_space<vmem>>, vector<1x1x8x128xf32>,
      %c0_82 = arith.constant 0 : index
      %c4 = arith.constant 4 : index
      %c0_83 = arith.constant 0 : index
      %c0_84 = arith.constant 0 : index
      %157 = vector.load %arg4[%c0_82, %c4, %c0_83, %c0_84] : memref<1x10x8x128xf32, #tpu.memory_space<vmem>>, vector<1x1x8x128xf32>
      %158 = vector.shape_cast %157 : vector<1x1x8x128xf32> to vector<8x128xf32>
      %159 = arith.addf %158, %107 : vector<8x128xf32>
      %c0_85 = arith.constant 0 : index
      %c4_86 = arith.constant 4 : index
      %c0_87 = arith.constant 0 : index
      %c0_88 = arith.constant 0 : index
      %160 = vector.load %arg4[%c0_85, %c4_86, %c0_87, %c0_88] : memref<1x10x8x128xf32, #tpu.memory_space<vmem>>, vector<1x1x8x128xf32>
      %161 = vector.shape_cast %160 : vector<1x1x8x128xf32> to vector<8x128xf32>
      %162 = vector.shape_cast %159 : vector<8x128xf32> to vector<1x1x8x128xf32>
      tpu.vector_store %arg4[%c0_85, %c4_86, %c0_87, %c0_88], %162 {strides = array<i32>} : memref<1x10x8x128xf32, #tpu.memory_space<vmem>>, vector<1x1x8x128xf32>,
      %c0_89 = arith.constant 0 : index
      %c5 = arith.constant 5 : index
      %c0_90 = arith.constant 0 : index
      %c0_91 = arith.constant 0 : index
      %163 = vector.load %arg4[%c0_89, %c5, %c0_90, %c0_91] : memref<1x10x8x128xf32, #tpu.memory_space<vmem>>, vector<1x1x8x128xf32>
      %164 = vector.shape_cast %163 : vector<1x1x8x128xf32> to vector<8x128xf32>
      %165 = arith.addf %164, %112 : vector<8x128xf32>
      %c0_92 = arith.constant 0 : index
      %c5_93 = arith.constant 5 : index
      %c0_94 = arith.constant 0 : index
      %c0_95 = arith.constant 0 : index
      %166 = vector.load %arg4[%c0_92, %c5_93, %c0_94, %c0_95] : memref<1x10x8x128xf32, #tpu.memory_space<vmem>>, vector<1x1x8x128xf32>
      %167 = vector.shape_cast %166 : vector<1x1x8x128xf32> to vector<8x128xf32>
      %168 = vector.shape_cast %165 : vector<8x128xf32> to vector<1x1x8x128xf32>
      tpu.vector_store %arg4[%c0_92, %c5_93, %c0_94, %c0_95], %168 {strides = array<i32>} : memref<1x10x8x128xf32, #tpu.memory_space<vmem>>, vector<1x1x8x128xf32>,
      %c0_96 = arith.constant 0 : index
      %c6 = arith.constant 6 : index
      %c0_97 = arith.constant 0 : index
      %c0_98 = arith.constant 0 : index
      %169 = vector.load %arg4[%c0_96, %c6, %c0_97, %c0_98] : memref<1x10x8x128xf32, #tpu.memory_space<vmem>>, vector<1x1x8x128xf32>
      %170 = vector.shape_cast %169 : vector<1x1x8x128xf32> to vector<8x128xf32>
      %171 = arith.addf %170, %117 : vector<8x128xf32>
      %c0_99 = arith.constant 0 : index
      %c6_100 = arith.constant 6 : index
      %c0_101 = arith.constant 0 : index
      %c0_102 = arith.constant 0 : index
      %172 = vector.load %arg4[%c0_99, %c6_100, %c0_101, %c0_102] : memref<1x10x8x128xf32, #tpu.memory_space<vmem>>, vector<1x1x8x128xf32>
      %173 = vector.shape_cast %172 : vector<1x1x8x128xf32> to vector<8x128xf32>
      %174 = vector.shape_cast %171 : vector<8x128xf32> to vector<1x1x8x128xf32>
      tpu.vector_store %arg4[%c0_99, %c6_100, %c0_101, %c0_102], %174 {strides = array<i32>} : memref<1x10x8x128xf32, #tpu.memory_space<vmem>>, vector<1x1x8x128xf32>,
      %c0_103 = arith.constant 0 : index
      %c7 = arith.constant 7 : index
      %c0_104 = arith.constant 0 : index
      %c0_105 = arith.constant 0 : index
      %175 = vector.load %arg4[%c0_103, %c7, %c0_104, %c0_105] : memref<1x10x8x128xf32, #tpu.memory_space<vmem>>, vector<1x1x8x128xf32>
      %176 = vector.shape_cast %175 : vector<1x1x8x128xf32> to vector<8x128xf32>
      %177 = arith.addf %176, %122 : vector<8x128xf32>
      %c0_106 = arith.constant 0 : index
      %c7_107 = arith.constant 7 : index
      %c0_108 = arith.constant 0 : index
      %c0_109 = arith.constant 0 : index
      %178 = vector.load %arg4[%c0_106, %c7_107, %c0_108, %c0_109] : memref<1x10x8x128xf32, #tpu.memory_space<vmem>>, vector<1x1x8x128xf32>
      %179 = vector.shape_cast %178 : vector<1x1x8x128xf32> to vector<8x128xf32>
      %180 = vector.shape_cast %177 : vector<8x128xf32> to vector<1x1x8x128xf32>
      tpu.vector_store %arg4[%c0_106, %c7_107, %c0_108, %c0_109], %180 {strides = array<i32>} : memref<1x10x8x128xf32, #tpu.memory_space<vmem>>, vector<1x1x8x128xf32>,
      %c0_110 = arith.constant 0 : index
      %c8 = arith.constant 8 : index
      %c0_111 = arith.constant 0 : index
      %c0_112 = arith.constant 0 : index
      %181 = vector.load %arg4[%c0_110, %c8, %c0_111, %c0_112] : memref<1x10x8x128xf32, #tpu.memory_space<vmem>>, vector<1x1x8x128xf32>
      %182 = vector.shape_cast %181 : vector<1x1x8x128xf32> to vector<8x128xf32>
      %183 = arith.addf %182, %127 : vector<8x128xf32>
      %c0_113 = arith.constant 0 : index
      %c8_114 = arith.constant 8 : index
      %c0_115 = arith.constant 0 : index
      %c0_116 = arith.constant 0 : index
      %184 = vector.load %arg4[%c0_113, %c8_114, %c0_115, %c0_116] : memref<1x10x8x128xf32, #tpu.memory_space<vmem>>, vector<1x1x8x128xf32>
      %185 = vector.shape_cast %184 : vector<1x1x8x128xf32> to vector<8x128xf32>
      %186 = vector.shape_cast %183 : vector<8x128xf32> to vector<1x1x8x128xf32>
      tpu.vector_store %arg4[%c0_113, %c8_114, %c0_115, %c0_116], %186 {strides = array<i32>} : memref<1x10x8x128xf32, #tpu.memory_space<vmem>>, vector<1x1x8x128xf32>,
      %c0_117 = arith.constant 0 : index
      %c9 = arith.constant 9 : index
      %c0_118 = arith.constant 0 : index
      %c0_119 = arith.constant 0 : index
      %187 = vector.load %arg4[%c0_117, %c9, %c0_118, %c0_119] : memref<1x10x8x128xf32, #tpu.memory_space<vmem>>, vector<1x1x8x128xf32>
      %188 = vector.shape_cast %187 : vector<1x1x8x128xf32> to vector<8x128xf32>
      %189 = arith.addf %188, %132 : vector<8x128xf32>
      %c0_120 = arith.constant 0 : index
      %c9_121 = arith.constant 9 : index
      %c0_122 = arith.constant 0 : index
      %c0_123 = arith.constant 0 : index
      %190 = vector.load %arg4[%c0_120, %c9_121, %c0_122, %c0_123] : memref<1x10x8x128xf32, #tpu.memory_space<vmem>>, vector<1x1x8x128xf32>
      %191 = vector.shape_cast %190 : vector<1x1x8x128xf32> to vector<8x128xf32>
      %192 = vector.shape_cast %189 : vector<8x128xf32> to vector<1x1x8x128xf32>
      tpu.vector_store %arg4[%c0_120, %c9_121, %c0_122, %c0_123], %192 {strides = array<i32>} : memref<1x10x8x128xf32, #tpu.memory_space<vmem>>, vector<1x1x8x128xf32>,
    } else {
    }
    return
  }
  func.func @transform_0(%arg0: i32, %arg1: i32) -> (i32, i32) {
    %c1_i32 = arith.constant 1 : i32
    %0 = arith.muli %arg0, %c1_i32 : i32
    %1 = arith.addi %0, %arg1 : i32
    %c0_i32 = arith.constant 0 : i32
    %2 = arith.minsi %1, %c0_i32 : i32
    %c0_i32_0 = arith.constant 0 : i32
    %c0_i32_1 = arith.constant 0 : i32
    return %2, %c0_i32_0 : i32, i32
  }
  func.func @transform_1(%arg0: i32, %arg1: i32) -> (i32, i32) {
    %c1_i32 = arith.constant 1 : i32
    %0 = arith.muli %arg0, %c1_i32 : i32
    %1 = arith.addi %0, %arg1 : i32
    %c0_i32 = arith.constant 0 : i32
    %2 = arith.minsi %1, %c0_i32 : i32
    %c0_i32_0 = arith.constant 0 : i32
    %c0_i32_1 = arith.constant 0 : i32
    return %2, %c0_i32_0 : i32, i32
  }
  func.func @transform_2(%arg0: i32, %arg1: i32) -> (i32, i32, i32, i32) {
    %c0_i32 = arith.constant 0 : i32
    %c0_i32_0 = arith.constant 0 : i32
    %c0_i32_1 = arith.constant 0 : i32
    %c0_i32_2 = arith.constant 0 : i32
    return %arg0, %c0_i32, %c0_i32_0, %c0_i32_1 : i32, i32, i32, i32
  }
}

</mosaic_0001>

<llo_original>
// kernel: ece_pallas.1
$region0: #{ece_pallas.1}
  #allocation0 [shape = 'u32[]', space=smem, size = 0x4, offset = 0x4, fixed_abs, tag = 'smem constant byte address 0x4 - core index']
  #allocation1 [shape = 'u32[144,128]{1,0:T(1,128)}', space=vmem, size = 0x12000, scoped, tag = 'internal scratch']
  %s0 = inlined_call_operand.vmem [shape: f32[16,128], index: 0, kind: input, shape index: {}]
  %s1 = inlined_call_operand.vmem [shape: f32[16,128], index: 1, kind: input, shape index: {}]
  %s2 = inlined_call_operand.vmem [shape: f32[1,10,8,128], index: 2, kind: output, shape index: {}]
  %s3 = sld [smem:[#allocation0]]
  $region26: #{ece_pallas.1} parent=0
    _
  %s5 = ssub.s32 1, %s3
  %s6 = scalar_select 0, %s5, %s3
  // Predicated region
  $region2: #{ece_pallas.1} parent=0 // pred_check
    _
  $region3: #{ece_pallas.1} parent=0 // pred_check_branch
    %8 = sbr.rel (0) target = $region5
  $region4: #{ece_pallas.1} parent=0 // pred_region
    %s9 = sadd.s32 0, 0
    %p10 = scmp.lt.s32.totalorder %s9, 0
    %s11 = scalar_select %p10, %s9, 0
    %s12 = smul.u32 2, %s11
    %p13 = scmp.lt.s32.totalorder %s12, 1
    %s14 = scalar_select %p13, %s12, 1
    %s15 = smul.addr %s14, 8
    %s16 = scalar_lea.vmem %s0, %s15
    %s17 = sadd.s32 0, 0
    %p18 = scmp.lt.s32.totalorder %s17, 0
    %s19 = scalar_select %p18, %s17, 0
    %s20 = smul.u32 2, %s19
  $region5: #{ece_pallas.1} parent=0 // pred_fallthru
    _
  // Predicated region
  $region6: #{ece_pallas.1} parent=0 // pred_check
    _
  $region7: #{ece_pallas.1} parent=0 // pred_check_branch
    %22 = sbr.rel (0) target = $region9
  $region8: #{ece_pallas.1} parent=0 // pred_region
    %s23 = sadd.s32 0, 0
    %p24 = scmp.lt.s32.totalorder %s23, 0
    %s25 = scalar_select %p24, %s23, 0
    %s26 = smul.u32 2, %s25
    %p27 = scmp.lt.s32.totalorder %s26, 1
    %s28 = scalar_select %p27, %s26, 1
    %s29 = smul.addr %s28, 8
    %s30 = scalar_lea.vmem %s1, %s29
    %s31 = sadd.s32 0, 0
    %p32 = scmp.lt.s32.totalorder %s31, 0
    %s33 = scalar_select %p32, %s31, 0
    %s34 = smul.u32 2, %s33
  $region9: #{ece_pallas.1} parent=0 // pred_fallthru
    _
  %s35 = sadd.s32 0, 0
  %p36 = scmp.lt.s32.totalorder %s35, 0
  %s37 = scalar_select %p36, %s35, 0
  %s38 = smul.u32 2, %s37
  %p39 = scmp.lt.s32.totalorder %s38, 1
  %s40 = scalar_select %p39, %s38, 1
  %s41 = smul.addr %s40, 8
  %s42 = scalar_lea.vmem %s0, %s41
  %s43 = sadd.s32 0, 0
  %p44 = scmp.lt.s32.totalorder %s43, 0
  %s45 = scalar_select %p44, %s43, 0
  %s46 = smul.u32 2, %s45
  %p47 = scmp.lt.s32.totalorder %s46, 1
  %s48 = scalar_select %p47, %s46, 1
  %s49 = smul.addr %s48, 8
  %s50 = scalar_lea.vmem %s1, %s49
  %s51 = sadd.s32 0, 0
  %p52 = scmp.lt.s32.totalorder %s51, 0
  %s53 = scalar_select %p52, %s51, 0
  %s54 = smul.u32 2, %s53
  %p55 = scmp.lt.s32.totalorder %s54, 1
  %s56 = scalar_select %p55, %s54, 1
  %s57 = smul.addr %s56, 8
  %s58 = scalar_lea.vmem %s0, %s57
  %s59 = sadd.s32 0, 0
  %p60 = scmp.lt.s32.totalorder %s59, 0
  %s61 = scalar_select %p60, %s59, 0
  %s62 = smul.u32 2, %s61
  %s63 = sadd.s32 0, 0
  %p64 = scmp.lt.s32.totalorder %s63, 0
  %s65 = scalar_select %p64, %s63, 0
  %s66 = smul.u32 2, %s65
  %p67 = scmp.lt.s32.totalorder %s66, 1
  %s68 = scalar_select %p67, %s66, 1
  %s69 = smul.addr %s68, 8
  %s70 = scalar_lea.vmem %s1, %s69
  %s71 = sadd.s32 0, 0
  %p72 = scmp.lt.s32.totalorder %s71, 0
  %s73 = scalar_select %p72, %s71, 0
  %s74 = smul.u32 2, %s73
  %s75 = sadd.s32 0, 0
  %p76 = scmp.eq.s32.totalorder 0, 0
  // Predicated region
  $region10: #{ece_pallas.1} parent=0 // pred_check
    %p77 = pneg %p76
  $region11: #{ece_pallas.1} parent=0 // pred_check_branch
    %79 = sbr.rel (%p77) target = $region13
  $region12: #{ece_pallas.1} parent=0 // pred_region
    %80 = vst [vmem:[%s2] sm:$0xff] 0.0
    %81 = vst [vmem:[%s2 + $0x8] sm:$0xff] 0.0
    %82 = vst [vmem:[%s2 + $0x10] sm:$0xff] 0.0
    %83 = vst [vmem:[%s2 + $0x18] sm:$0xff] 0.0
    %84 = vst [vmem:[%s2 + $0x20] sm:$0xff] 0.0
    %85 = vst [vmem:[%s2 + $0x28] sm:$0xff] 0.0
    %86 = vst [vmem:[%s2 + $0x30] sm:$0xff] 0.0
    %87 = vst [vmem:[%s2 + $0x38] sm:$0xff] 0.0
    %88 = vst [vmem:[%s2 + $0x40] sm:$0xff] 0.0
    %89 = vst [vmem:[%s2 + $0x48] sm:$0xff] 0.0
  $region13: #{ece_pallas.1} parent=0 // pred_fallthru
    _
  %p90 = scmp.lt.s32.totalorder %s75, 1
  // Predicated region
  $region14: #{ece_pallas.1} parent=0 // pred_check
    %p91 = pneg %p90
  $region15: #{ece_pallas.1} parent=0 // pred_check_branch
    %93 = sbr.rel (%p91) target = $region17
  $region16: #{ece_pallas.1} parent=0 // pred_region
    %v94 = vld [vmem:[%s58] sm:$0xff]
    %v95 = vld [vmem:[%s70] sm:$0xff]
    %v96 = vadd.f32 %v94, %v95
    %v97 = vsub.f32 %v96, 1.0
    %v98 = vmul.f32 %v94, 10.0
    %v99 = vceil.f32 %v98
    %vm100 = vcmp.eq.f32.partialorder %v99, 1.0
    %v101 = vsel %vm100, %v97, 0.0
    %v102 = vadd.f32 %v101, 0.0
    %vm103 = vcmp.eq.f32.partialorder %v99, 2.0
    %v104 = vsel %vm103, %v97, 0.0
    %v105 = vadd.f32 %v104, 0.0
    %vm106 = vcmp.eq.f32.partialorder %v99, 3.0
    %v107 = vsel %vm106, %v97, 0.0
    %v108 = vadd.f32 %v107, 0.0
    %vm109 = vcmp.eq.f32.partialorder %v99, 4.0
    %v110 = vsel %vm109, %v97, 0.0
    %v111 = vadd.f32 %v110, 0.0
    %vm112 = vcmp.eq.f32.partialorder %v99, 5.0
    %v113 = vsel %vm112, %v97, 0.0
    %v114 = vadd.f32 %v113, 0.0
    %vm115 = vcmp.eq.f32.partialorder %v99, 6.0
    %v116 = vsel %vm115, %v97, 0.0
    %v117 = vadd.f32 %v116, 0.0
    %vm118 = vcmp.eq.f32.partialorder %v99, 7.0
    %v119 = vsel %vm118, %v97, 0.0
    %v120 = vadd.f32 %v119, 0.0
    %vm121 = vcmp.eq.f32.partialorder %v99, 8.0
    %v122 = vsel %vm121, %v97, 0.0
    %v123 = vadd.f32 %v122, 0.0
    %vm124 = vcmp.eq.f32.partialorder %v99, 9.0
    %v125 = vsel %vm124, %v97, 0.0
    %v126 = vadd.f32 %v125, 0.0
    %vm127 = vcmp.eq.f32.partialorder %v99, 10.0
    %v128 = vsel %vm127, %v97, 0.0
    %v129 = vadd.f32 %v128, 0.0
    %s130 = scalar_lea.vmem %s58, 8
    %v131 = vld [vmem:[%s130] sm:$0xff]
    %s132 = scalar_lea.vmem %s70, 8
    %v133 = vld [vmem:[%s132] sm:$0xff]
    %v134 = vadd.f32 %v131, %v133
    %v135 = vsub.f32 %v134, 1.0
    %v136 = vmul.f32 %v131, 10.0
    %v137 = vceil.f32 %v136
    %vm138 = vcmp.eq.f32.partialorder %v137, 1.0
    %v139 = vsel %vm138, %v135, 0.0
    %v140 = vadd.f32 %v102, %v139
    %vm141 = vcmp.eq.f32.partialorder %v137, 2.0
    %v142 = vsel %vm141, %v135, 0.0
    %v143 = vadd.f32 %v105, %v142
    %vm144 = vcmp.eq.f32.partialorder %v137, 3.0
    %v145 = vsel %vm144, %v135, 0.0
    %v146 = vadd.f32 %v108, %v145
    %vm147 = vcmp.eq.f32.partialorder %v137, 4.0
    %v148 = vsel %vm147, %v135, 0.0
    %v149 = vadd.f32 %v111, %v148
    %vm150 = vcmp.eq.f32.partialorder %v137, 5.0
    %v151 = vsel %vm150, %v135, 0.0
    %v152 = vadd.f32 %v114, %v151
    %vm153 = vcmp.eq.f32.partialorder %v137, 6.0
    %v154 = vsel %vm153, %v135, 0.0
    %v155 = vadd.f32 %v117, %v154
    %vm156 = vcmp.eq.f32.partialorder %v137, 7.0
    %v157 = vsel %vm156, %v135, 0.0
    %v158 = vadd.f32 %v120, %v157
    %vm159 = vcmp.eq.f32.partialorder %v137, 8.0
    %v160 = vsel %vm159, %v135, 0.0
    %v161 = vadd.f32 %v123, %v160
    %vm162 = vcmp.eq.f32.partialorder %v137, 9.0
    %v163 = vsel %vm162, %v135, 0.0
    %v164 = vadd.f32 %v126, %v163
    %vm165 = vcmp.eq.f32.partialorder %v137, 10.0
    %v166 = vsel %vm165, %v135, 0.0
    %v167 = vadd.f32 %v129, %v166
    %v168 = vld [vmem:[%s2] sm:$0xff]
    %v169 = vadd.f32 %v168, %v140
    %170 = vst [vmem:[%s2] sm:$0xff] %v169
    %s171 = scalar_lea.vmem %s2, 8
    %v172 = vld [vmem:[%s171] sm:$0xff]
    %v173 = vadd.f32 %v172, %v143
    %174 = vst [vmem:[%s171] sm:$0xff] %v173
    %s175 = scalar_lea.vmem %s2, 16
    %v176 = vld [vmem:[%s175] sm:$0xff]
    %v177 = vadd.f32 %v176, %v146
    %178 = vst [vmem:[%s175] sm:$0xff] %v177
    %s179 = scalar_lea.vmem %s2, 24
    %v180 = vld [vmem:[%s179] sm:$0xff]
    %v181 = vadd.f32 %v180, %v149
    %182 = vst [vmem:[%s179] sm:$0xff] %v181
    %s183 = scalar_lea.vmem %s2, 32
    %v184 = vld [vmem:[%s183] sm:$0xff]
    %v185 = vadd.f32 %v184, %v152
    %186 = vst [vmem:[%s183] sm:$0xff] %v185
    %s187 = scalar_lea.vmem %s2, 40
    %v188 = vld [vmem:[%s187] sm:$0xff]
    %v189 = vadd.f32 %v188, %v155
    %190 = vst [vmem:[%s187] sm:$0xff] %v189
    %s191 = scalar_lea.vmem %s2, 48
    %v192 = vld [vmem:[%s191] sm:$0xff]
    %v193 = vadd.f32 %v192, %v158
    %194 = vst [vmem:[%s191] sm:$0xff] %v193
    %s195 = scalar_lea.vmem %s2, 56
    %v196 = vld [vmem:[%s195] sm:$0xff]
    %v197 = vadd.f32 %v196, %v161
    %198 = vst [vmem:[%s195] sm:$0xff] %v197
    %s199 = scalar_lea.vmem %s2, 64
    %v200 = vld [vmem:[%s199] sm:$0xff]
    %v201 = vadd.f32 %v200, %v164
    %202 = vst [vmem:[%s199] sm:$0xff] %v201
    %s203 = scalar_lea.vmem %s2, 72
    %v204 = vld [vmem:[%s203] sm:$0xff]
    %v205 = vadd.f32 %v204, %v167
    %206 = vst [vmem:[%s203] sm:$0xff] %v205
  $region17: #{ece_pallas.1} parent=0 // pred_fallthru
    _
  // Predicated region
  $region18: #{ece_pallas.1} parent=0 // pred_check
    _
  $region19: #{ece_pallas.1} parent=0 // pred_check_branch
    %208 = sbr.rel (0) target = $region21
  $region20: #{ece_pallas.1} parent=0 // pred_region
    _
  $region21: #{ece_pallas.1} parent=0 // pred_fallthru
    _
  // Predicated region
  $region22: #{ece_pallas.1} parent=0 // pred_check
    _
  $region23: #{ece_pallas.1} parent=0 // pred_check_branch
    %210 = sbr.rel (0) target = $region25
  $region24: #{ece_pallas.1} parent=0 // pred_region
    _
  $region25: #{ece_pallas.1} parent=0 // pred_fallthru
    _

</llo_original>
